<compile_context>
chip_gen: v7x
topology: tpu7x:2x2x1
jax: 0.10.0
libtpu: 0.0.40
codegen_flags: <defaults>
</compile_context>

<pallas_src>
import functools
import math

import jax
import jax.numpy as jnp
from jax.experimental import pallas as pl
from jax.experimental.pallas import tpu as pltpu

_NSR_EPS = 1e-3  # epsilon in calc_per_channel_noise_to_signal_ratio (ptdeco default)


def _round_up(v: int, m: int) -> int:
    return (v + m - 1) // m * m


def _lockd_linear_kernel(
    x_ref,        # (TR, IN_P)            VMEM   row tile of x
    wcat_ref,     # (IN_P, OUT_P + H_P)   VMEM   [W_orig^T | W_0^T]       (resident)
    b_orig_ref,   # (1, OUT_P)            VMEM                            (resident)
    w1m_ref,      # (H_P, OUT_P)          VMEM   mask[:,None] * W_1^T     (resident)
    b1_ref,       # (1, OUT_P)            VMEM                            (resident)
    y_ref,        # (TR, OUT_P)           VMEM   out: y_orig row tile
    part_ref,     # (1, 3, OUT_P)         VMEM   out: [sum_y, sum_y2, sum_sqdiff]
    *,
    out_p: int,
    total_rows: int,
    needs_row_mask: bool,
):
    tr = x_ref.shape[0]

    # Fused matmul: one pass of x over the MXU for both y_orig and hidden.
    # Operands stay in their native dtype; accumulate in f32 on the MXU.
    z = jnp.dot(x_ref[...], wcat_ref[...], preferred_element_type=jnp.float32)
    y_orig = z[:, :out_p] + b_orig_ref[...].astype(jnp.float32)        # (TR, OUT_P)
    hidden = z[:, out_p:]                                              # (TR, H_P)

    # Decomposed path: mask already folded into W1^T in the wrapper.
    y_deco = (
        jnp.dot(hidden.astype(w1m_ref.dtype), w1m_ref[...],
                preferred_element_type=jnp.float32)
        + b1_ref[...].astype(jnp.float32)
    )

    y_ref[...] = y_orig.astype(y_ref.dtype)

    # Streaming NSR statistics for this row tile (padded rows masked out via a
    # (TR, 1) validity column; skipped entirely when rows need no padding).
    if needs_row_mask:
        row0 = pl.program_id(0) * tr
        row_ids = jax.lax.broadcasted_iota(jnp.int32, (tr, 1), 0) + row0
        valid = (row_ids < total_rows).astype(jnp.float32)             # (TR, 1)
        yv = y_orig * valid
    else:
        valid = None
        yv = y_orig

    sum_y = jnp.sum(yv, axis=0, keepdims=True)                         # (1, OUT_P)
    sum_y2 = jnp.sum(y_orig * yv, axis=0, keepdims=True)               # (1, OUT_P)
    diff = y_deco - y_orig
    dsq = diff * diff
    if valid is not None:
        dsq = dsq * valid
    sum_sq = jnp.sum(dsq, axis=0, keepdims=True)                       # (1, OUT_P)

    stats = jnp.concatenate([sum_y, sum_y2, sum_sq], axis=0)           # (3, OUT_P)
    part_ref[...] = stats[None, :, :].astype(part_ref.dtype)


@jax.jit
def wrapped_lockd_linear_forward(x, w_orig, b_orig, w0, w1, b1, mask):
    """Returns (y_orig, nsr) like WrappedLOCKDLinear.forward + get_nsr().

    Weights are in PyTorch layout: w_orig (OUT, IN), w0 (H, IN), w1 (OUT, H).
    x may be 2D/3D/4D; leading dims are flattened into rows (matches the
    module's non_channel_dim handling).
    """
    orig_shape = x.shape
    in_features = orig_shape[-1]
    out_features, _ = w_orig.shape
    hidden_features = w0.shape[0]
    rows = math.prod(orig_shape[:-1])

    # Lane-dense padded dims (multiples of 128 for MXU / unmasked vector stores).
    in_p = _round_up(in_features, 128)
    out_p = _round_up(out_features, 128)
    h_p = _round_up(hidden_features, 128)

    itm = jnp.dtype(x.dtype).itemsize

    def _vmem_bytes(tr: int) -> int:
        # resident weights/biases (count 2x for buffering headroom) +
        # double-buffered x/y tiles + partial-sum output blocks.
        w_bytes = (in_p * (out_p + h_p) + h_p * out_p + 2 * out_p) * itm
        io_bytes = 2 * (tr * in_p * itm + tr * out_p * itm + 3 * out_p * 4)
        return 2 * w_bytes + io_bytes

    # Row tile: as large as fits a conservative (v7x-safe) VMEM budget, multiple of 8.
    # TODO(synk): for layers whose resident weights alone exceed the budget, add a
    # K-/N-tiled weight-streaming grid axis instead of only shrinking the row tile.
    tile_budget = 40 << 20
    tr = min(512, _round_up(min(rows, 512), 8))
    while tr > 8 and _vmem_bytes(tr) > tile_budget:
        tr = _round_up(max(tr // 2, 8), 8)

    rows_p = _round_up(rows, tr)
    num_tiles = rows_p // tr
    vmem_limit = int(min(max(_vmem_bytes(tr) + (8 << 20), 32 << 20), 64 << 20))

    # Zero-pad operands (zeros do not change the math; padded rows are masked
    # in-kernel and padded channels are sliced away below).
    x2 = x.reshape(rows, in_features)
    x_pad = jnp.zeros((rows_p, in_p), x.dtype).at[:rows, :in_features].set(x2)

    w_cat = jnp.zeros((in_p, out_p + h_p), w_orig.dtype)
    w_cat = w_cat.at[:in_features, :out_features].set(w_orig.T)
    w_cat = w_cat.at[:in_features, out_p:out_p + hidden_features].set(w0.T)

    # Fold the Gumbel mask into W1^T: (mask*hidden) @ W1^T == hidden @ (mask[:,None]*W1^T).
    w1_eff = (w1 * mask[jnp.newaxis, :]).astype(w1.dtype)              # (OUT, H)
    w1_pad = jnp.zeros((h_p, out_p), w1.dtype).at[:hidden_features, :out_features].set(w1_eff.T)

    b_orig_pad = jnp.zeros((1, out_p), b_orig.dtype).at[0, :out_features].set(b_orig)
    b1_pad = jnp.zeros((1, out_p), b1.dtype).at[0, :out_features].set(b1)

    kernel = functools.partial(
        _lockd_linear_kernel,
        out_p=out_p,
        total_rows=rows,
        needs_row_mask=(rows_p != rows),
    )

    y_pad, partials = pl.pallas_call(
        kernel,
        grid=(num_tiles,),
        in_specs=[
            pl.BlockSpec((tr, in_p), lambda i: (i, 0)),           # x row tile
            pl.BlockSpec((in_p, out_p + h_p), lambda i: (0, 0)),  # [W_orig^T | W0^T]
            pl.BlockSpec((1, out_p), lambda i: (0, 0)),           # b_orig
            pl.BlockSpec((h_p, out_p), lambda i: (0, 0)),         # mask-folded W1^T
            pl.BlockSpec((1, out_p), lambda i: (0, 0)),           # b1
        ],
        out_specs=(
            pl.BlockSpec((tr, out_p), lambda i: (i, 0)),          # y_orig row tile
            pl.BlockSpec((1, 3, out_p), lambda i: (i, 0, 0)),     # per-tile partial sums
        ),
        out_shape=(
            jax.ShapeDtypeStruct((rows_p, out_p), x.dtype),
            jax.ShapeDtypeStruct((num_tiles, 3, out_p), jnp.float32),
        ),
        compiler_params=pltpu.CompilerParams(
            dimension_semantics=("parallel",),
            vmem_limit_bytes=vmem_limit,
        ),
    )(x_pad, w_cat, b_orig_pad, w1_pad, b1_pad)

    # Tiny finalize in JAX glue (sum over tiles, variance, per-channel NSR mean).
    stats = jnp.sum(partials, axis=0)                 # (3, OUT_P)
    sum_y = stats[0, :out_features]
    sum_y2 = stats[1, :out_features]
    sum_sq = stats[2, :out_features]
    n = float(rows)
    denom = float(max(rows - 1, 1))                   # torch.var is unbiased; guard rows == 1
    var_y = (sum_y2 - sum_y * sum_y / n) / denom
    nsr = jnp.mean((sum_sq / n) / (var_y + _NSR_EPS))

    y = y_pad[:rows, :out_features].reshape(*orig_shape[:-1], out_features)
    return y, nsr


def sample_from_logits(key, logits, tau=0.5):
    """JAX port of sample_from_logits (gumbel_softmax(tau=0.5, hard=False))."""
    h = logits.shape[0]
    stacked = jnp.stack([logits, jnp.zeros_like(logits)], axis=1)   # (H, 2)
    g = jax.random.gumbel(key, shape=(h, 2), dtype=logits.dtype)
    gs = jax.nn.softmax((stacked + g) / tau, axis=1)[:, 0]
    return jnp.where(logits < 0.0, jnp.zeros_like(gs), gs)


if __name__ == "__main__":
    # Small shapes: Linear(in_features=32, out_features=16) -> hidden=16,
    # applied to x of shape (batch=2, seq=4, in_features=32) (3D path of the module).
    batch, seq, in_features, out_features = 2, 4, 32, 16
    hidden_features = min(in_features, out_features)

    root = jax.random.PRNGKey(0)
    kx, kwo, kbo, kw0, kw1, kb1, kgumbel = jax.random.split(root, 7)

    # Deterministic parameter init (PyTorch-Linear-style uniform bounds).
    bound_o = 1.0 / (in_features ** 0.5)
    bound_1 = 1.0 / (hidden_features ** 0.5)
    w_orig = jax.random.uniform(kwo, (out_features, in_features),
                                minval=-bound_o, maxval=bound_o, dtype=jnp.float32)
    b_orig = jax.random.uniform(kbo, (out_features,),
                                minval=-bound_o, maxval=bound_o, dtype=jnp.float32)
    w0 = jax.random.uniform(kw0, (hidden_features, in_features),
                            minval=-bound_o, maxval=bound_o, dtype=jnp.float32)
    w1 = jax.random.uniform(kw1, (out_features, hidden_features),
                            minval=-bound_1, maxval=bound_1, dtype=jnp.float32)
    b1 = jax.random.uniform(kb1, (out_features,),
                            minval=-bound_1, maxval=bound_1, dtype=jnp.float32)
    logits = 3.0 * jnp.ones((hidden_features,), dtype=jnp.float32)

    x = jax.random.normal(kx, (batch, seq, in_features), dtype=jnp.float32)

    # Stochastic mask (glue, outside the kernel — randomness per forward call).
    mask = sample_from_logits(kgumbel, logits)

    y_orig, nsr = wrapped_lockd_linear_forward(x, w_orig, b_orig, w0, w1, b1, mask)
    jax.block_until_ready((y_orig, nsr))

    # Pure-JAX reference check.
    x2 = x.reshape(-1, in_features)
    y_ref2 = x2 @ w_orig.T + b_orig
    hidden_ref = x2 @ w0.T
    y_deco_ref = (mask * hidden_ref) @ w1.T + b1
    var_ref = jnp.var(y_ref2, axis=0, ddof=1)
    nsr_ref = jnp.mean(
        jnp.mean((y_deco_ref - y_ref2) ** 2, axis=0) / (var_ref + _NSR_EPS)
    )
    y_ref = y_ref2.reshape(batch, seq, out_features)

    assert jnp.allclose(y_orig, y_ref, atol=1e-5, rtol=1e-5)
    assert jnp.allclose(nsr, nsr_ref, atol=1e-4, rtol=1e-4)

    print("KERNEL_OK")
</pallas_src>

<mosaic_0001>
module attributes {stable_mosaic.version = 11 : i64} {
  func.func @_lockd_linear_kernel(%arg0: i32, %arg1: memref<8x128xf32, #tpu.memory_space<vmem>>, %arg2: memref<128x256xf32, #tpu.memory_space<vmem>>, %arg3: memref<1x128xf32, #tpu.memory_space<vmem>>, %arg4: memref<128x128xf32, #tpu.memory_space<vmem>>, %arg5: memref<1x128xf32, #tpu.memory_space<vmem>>, %arg6: memref<8x128xf32, #tpu.memory_space<vmem>>, %arg7: memref<1x3x128xf32, #tpu.memory_space<vmem>>) attributes {dimension_semantics = [#tpu.dimension_semantics<parallel>], iteration_bounds = array<i64: 1>, scalar_prefetch = 0 : i64, scratch_operands = 0 : i64, tpu.core_type = #tpu.core_type<tc>, window_params = [{transform_indices = @transform_0, window_bounds = array<i64: 8, 128>}, {pipeline_mode = #tpu.pipeline_mode<synchronous>, transform_indices = @transform_1, window_bounds = array<i64: 128, 256>}, {pipeline_mode = #tpu.pipeline_mode<synchronous>, transform_indices = @transform_2, window_bounds = array<i64: 1, 128>}, {pipeline_mode = #tpu.pipeline_mode<synchronous>, transform_indices = @transform_3, window_bounds = array<i64: 128, 128>}, {pipeline_mode = #tpu.pipeline_mode<synchronous>, transform_indices = @transform_4, window_bounds = array<i64: 1, 128>}, {transform_indices = @transform_5, window_bounds = array<i64: 8, 128>}, {transform_indices = @transform_6, window_bounds = array<i64: 1, 3, 128>}]} {
    %c0 = arith.constant 0 : index
    %c0_0 = arith.constant 0 : index
    %0 = vector.load %arg1[%c0, %c0_0] : memref<8x128xf32, #tpu.memory_space<vmem>>, vector<8x128xf32>
    %c0_1 = arith.constant 0 : index
    %c0_2 = arith.constant 0 : index
    %1 = vector.load %arg2[%c0_1, %c0_2] : memref<128x256xf32, #tpu.memory_space<vmem>>, vector<128x256xf32>
    %cst = arith.constant dense<0.000000e+00> : vector<8x256xf32>
    %2 = tpu.matmul %0, %1, %cst {dimension_numbers = #tpu.dot_dimension_numbers<[1], [0], [0], [1], [0, 0, 1, 1], [], []>} : vector<8x128xf32>, vector<128x256xf32>, vector<8x256xf32> -> vector<8x256xf32>
    %3 = vector.extract_strided_slice %2 {offsets = [0, 0], sizes = [8, 128], strides = [1, 1]} : vector<8x256xf32> to vector<8x128xf32>
    %c0_3 = arith.constant 0 : index
    %c0_4 = arith.constant 0 : index
    %4 = vector.load %arg3[%c0_3, %c0_4] : memref<1x128xf32, #tpu.memory_space<vmem>>, vector<1x128xf32>
    %5 = vector.broadcast %4 : vector<1x128xf32> to vector<8x128xf32>
    %6 = arith.addf %3, %5 : vector<8x128xf32>
    %7 = vector.extract_strided_slice %2 {offsets = [0, 128], sizes = [8, 128], strides = [1, 1]} : vector<8x256xf32> to vector<8x128xf32>
    %c0_5 = arith.constant 0 : index
    %c0_6 = arith.constant 0 : index
    %8 = vector.load %arg4[%c0_5, %c0_6] : memref<128x128xf32, #tpu.memory_space<vmem>>, vector<128x128xf32>
    %cst_7 = arith.constant dense<0.000000e+00> : vector<8x128xf32>
    %9 = tpu.matmul %7, %8, %cst_7 {dimension_numbers = #tpu.dot_dimension_numbers<[1], [0], [0], [1], [0, 0, 1, 1], [], []>} : vector<8x128xf32>, vector<128x128xf32>, vector<8x128xf32> -> vector<8x128xf32>
    %c0_8 = arith.constant 0 : index
    %c0_9 = arith.constant 0 : index
    %10 = vector.load %arg5[%c0_8, %c0_9] : memref<1x128xf32, #tpu.memory_space<vmem>>, vector<1x128xf32>
    %11 = vector.broadcast %10 : vector<1x128xf32> to vector<8x128xf32>
    %12 = arith.addf %9, %11 : vector<8x128xf32>
    %c0_10 = arith.constant 0 : index
    %c0_11 = arith.constant 0 : index
    %13 = vector.load %arg6[%c0_10, %c0_11] : memref<8x128xf32, #tpu.memory_space<vmem>>, vector<8x128xf32>
    tpu.vector_store %arg6[%c0_10, %c0_11], %6 {strides = array<i32>} : memref<8x128xf32, #tpu.memory_space<vmem>>, vector<8x128xf32>,
    %cst_12 = arith.constant dense<0.000000e+00> : vector<128xf32>
    %14 = vector.multi_reduction <add>, %6, %cst_12 [0] : vector<8x128xf32> to vector<128xf32>
    %15 = vector.shape_cast %14 : vector<128xf32> to vector<1x128xf32>
    %16 = arith.mulf %6, %6 : vector<8x128xf32>
    %cst_13 = arith.constant dense<0.000000e+00> : vector<128xf32>
    %17 = vector.multi_reduction <add>, %16, %cst_13 [0] : vector<8x128xf32> to vector<128xf32>
    %18 = vector.shape_cast %17 : vector<128xf32> to vector<1x128xf32>
    %19 = arith.subf %12, %6 : vector<8x128xf32>
    %20 = arith.mulf %19, %19 : vector<8x128xf32>
    %cst_14 = arith.constant dense<0.000000e+00> : vector<128xf32>
    %21 = vector.multi_reduction <add>, %20, %cst_14 [0] : vector<8x128xf32> to vector<128xf32>
    %22 = vector.shape_cast %21 : vector<128xf32> to vector<1x128xf32>
    %23 = tpu.concatenate %15, %18, %22 in 0 : vector<1x128xf32>, vector<1x128xf32>, vector<1x128xf32> -> vector<3x128xf32>
    %24 = vector.shape_cast %23 : vector<3x128xf32> to vector<1x3x128xf32>
    %c0_15 = arith.constant 0 : index
    %c0_16 = arith.constant 0 : index
    %c0_17 = arith.constant 0 : index
    %25 = vector.load %arg7[%c0_15, %c0_16, %c0_17] : memref<1x3x128xf32, #tpu.memory_space<vmem>>, vector<1x3x128xf32>
    tpu.vector_store %arg7[%c0_15, %c0_16, %c0_17], %24 {strides = array<i32>} : memref<1x3x128xf32, #tpu.memory_space<vmem>>, vector<1x3x128xf32>,
    return
  }
  func.func @transform_0(%arg0: i32) -> (i32, i32) {
    %c0_i32 = arith.constant 0 : i32
    %c0_i32_0 = arith.constant 0 : i32
    return %arg0, %c0_i32 : i32, i32
  }
  func.func @transform_1(%arg0: i32) -> (i32, i32) {
    %c0_i32 = arith.constant 0 : i32
    %c0_i32_0 = arith.constant 0 : i32
    %c0_i32_1 = arith.constant 0 : i32
    return %c0_i32, %c0_i32_0 : i32, i32
  }
  func.func @transform_2(%arg0: i32) -> (i32, i32) {
    %c0_i32 = arith.constant 0 : i32
    %c0_i32_0 = arith.constant 0 : i32
    %c0_i32_1 = arith.constant 0 : i32
    return %c0_i32, %c0_i32_0 : i32, i32
  }
  func.func @transform_3(%arg0: i32) -> (i32, i32) {
    %c0_i32 = arith.constant 0 : i32
    %c0_i32_0 = arith.constant 0 : i32
    %c0_i32_1 = arith.constant 0 : i32
    return %c0_i32, %c0_i32_0 : i32, i32
  }
  func.func @transform_4(%arg0: i32) -> (i32, i32) {
    %c0_i32 = arith.constant 0 : i32
    %c0_i32_0 = arith.constant 0 : i32
    %c0_i32_1 = arith.constant 0 : i32
    return %c0_i32, %c0_i32_0 : i32, i32
  }
  func.func @transform_5(%arg0: i32) -> (i32, i32) {
    %c0_i32 = arith.constant 0 : i32
    %c0_i32_0 = arith.constant 0 : i32
    return %arg0, %c0_i32 : i32, i32
  }
  func.func @transform_6(%arg0: i32) -> (i32, i32, i32) {
    %c0_i32 = arith.constant 0 : i32
    %c0_i32_0 = arith.constant 0 : i32
    %c0_i32_1 = arith.constant 0 : i32
    return %arg0, %c0_i32, %c0_i32_0 : i32, i32, i32
  }
}

</mosaic_0001>

<llo_original>
// kernel: wrapped_lockd_linear_forward.1
$region0: #{wrapped_lockd_linear_forward.1}
  #allocation0 [shape = 'u32[]', space=smem, size = 0x4, offset = 0x4, fixed_abs, tag = 'smem constant byte address 0x4 - core index']
  #allocation1 [shape = 'u32[144,128]{1,0:T(1,128)}', space=vmem, size = 0x12000, scoped, tag = 'internal scratch']
  %s0 = inlined_call_operand.vmem [shape: f32[8,128], index: 0, kind: input, shape index: {}]
  %s1 = inlined_call_operand.vmem [shape: f32[128,256], index: 1, kind: input, shape index: {}]
  %s2 = inlined_call_operand.vmem [shape: f32[1,128], index: 2, kind: input, shape index: {}]
  %s3 = inlined_call_operand.vmem [shape: f32[128,128], index: 3, kind: input, shape index: {}]
  %s4 = inlined_call_operand.vmem [shape: f32[1,128], index: 4, kind: input, shape index: {}]
  %s5 = inlined_call_operand.hbm [shape: f32[8,128], index: 5, kind: output, shape index: {0}]
  %s6 = inlined_call_operand.vmem [shape: f32[1,3,128], index: 6, kind: output, shape index: {1}]
  %7 = xla_tuple %s5, %s6
  %s8 = sld [smem:[#allocation0]]
  $region38: #{wrapped_lockd_linear_forward.1} parent=0
    _
  %s10 = ssub.s32 1, %s8
  %s11 = scalar_select 0, %s10, %s8
  $region1: #{wrapped_lockd_linear_forward.1} parent=0
    #allocation2 [shape = 'u8[4096]{0}', space=vmem, size = 0x1000, scoped, tag = 'output window, operand 0, single buffered']
    #allocation3 [shape = 's32[1]{0}', space=sflag, size = 0x4, scoped, tag = 'scoped memory for wrapped_lockd_linear_forward.1']
    %12 = vsyncpa [#allocation3], 0
    // Predicated region
    $region2: #{wrapped_lockd_linear_forward.1} parent=1 // pred_check
      _
    $region3: #{wrapped_lockd_linear_forward.1} parent=1 // pred_check_branch
      %14 = sbr.rel (0) target = $region5
    $region4: #{wrapped_lockd_linear_forward.1} parent=1 // pred_region
      _
    $region5: #{wrapped_lockd_linear_forward.1} parent=1 // pred_fallthru
      _
    // Predicated region
    $region6: #{wrapped_lockd_linear_forward.1} parent=1 // pred_check
      _
    $region7: #{wrapped_lockd_linear_forward.1} parent=1 // pred_check_branch
      %16 = sbr.rel (0) target = $region9
    $region8: #{wrapped_lockd_linear_forward.1} parent=1 // pred_region
      _
    $region9: #{wrapped_lockd_linear_forward.1} parent=1 // pred_fallthru
      _
    // Predicated region
    $region10: #{wrapped_lockd_linear_forward.1} parent=1 // pred_check
      _
    $region11: #{wrapped_lockd_linear_forward.1} parent=1 // pred_check_branch
      %18 = sbr.rel (0) target = $region13
    $region12: #{wrapped_lockd_linear_forward.1} parent=1 // pred_region
      _
    $region13: #{wrapped_lockd_linear_forward.1} parent=1 // pred_fallthru
      _
    // Predicated region
    $region14: #{wrapped_lockd_linear_forward.1} parent=1 // pred_check
      _
    $region15: #{wrapped_lockd_linear_forward.1} parent=1 // pred_check_branch
      %20 = sbr.rel (0) target = $region17
    $region16: #{wrapped_lockd_linear_forward.1} parent=1 // pred_region
      _
    $region17: #{wrapped_lockd_linear_forward.1} parent=1 // pred_fallthru
      _
    // Predicated region
    $region18: #{wrapped_lockd_linear_forward.1} parent=1 // pred_check
      _
    $region19: #{wrapped_lockd_linear_forward.1} parent=1 // pred_check_branch
      %22 = sbr.rel (0) target = $region21
    $region20: #{wrapped_lockd_linear_forward.1} parent=1 // pred_region
      _
    $region21: #{wrapped_lockd_linear_forward.1} parent=1 // pred_fallthru
      _
    %v23 = vld [vmem:[%s0] sm:$0xff]
    %v24 = vld [vmem:[%s1] sm:$0xff]
    %v25 = vld [vmem:[%s1 + $0x8] sm:$0xff]
    %v26 = vld [vmem:[%s1 + $0x10] sm:$0xff]
    %v27 = vld [vmem:[%s1 + $0x18] sm:$0xff]
    %v28 = vld [vmem:[%s1 + $0x20] sm:$0xff]
    %v29 = vld [vmem:[%s1 + $0x28] sm:$0xff]
    %v30 = vld [vmem:[%s1 + $0x30] sm:$0xff]
    %v31 = vld [vmem:[%s1 + $0x38] sm:$0xff]
    %v32 = vld [vmem:[%s1 + $0x40] sm:$0xff]
    %v33 = vld [vmem:[%s1 + $0x48] sm:$0xff]
    %v34 = vld [vmem:[%s1 + $0x50] sm:$0xff]
    %v35 = vld [vmem:[%s1 + $0x58] sm:$0xff]
    %v36 = vld [vmem:[%s1 + $0x60] sm:$0xff]
    %v37 = vld [vmem:[%s1 + $0x68] sm:$0xff]
    %v38 = vld [vmem:[%s1 + $0x70] sm:$0xff]
    %v39 = vld [vmem:[%s1 + $0x78] sm:$0xff]
    %v40 = vld [vmem:[%s1 + $0x80] sm:$0xff]
    %v41 = vld [vmem:[%s1 + $0x88] sm:$0xff]
    %v42 = vld [vmem:[%s1 + $0x90] sm:$0xff]
    %v43 = vld [vmem:[%s1 + $0x98] sm:$0xff]
    %v44 = vld [vmem:[%s1 + $0xa0] sm:$0xff]
    %v45 = vld [vmem:[%s1 + $0xa8] sm:$0xff]
    %v46 = vld [vmem:[%s1 + $0xb0] sm:$0xff]
    %v47 = vld [vmem:[%s1 + $0xb8] sm:$0xff]
    %v48 = vld [vmem:[%s1 + $0xc0] sm:$0xff]
    %v49 = vld [vmem:[%s1 + $0xc8] sm:$0xff]
    %v50 = vld [vmem:[%s1 + $0xd0] sm:$0xff]
    %v51 = vld [vmem:[%s1 + $0xd8] sm:$0xff]
    %v52 = vld [vmem:[%s1 + $0xe0] sm:$0xff]
    %v53 = vld [vmem:[%s1 + $0xe8] sm:$0xff]
    %v54 = vld [vmem:[%s1 + $0xf0] sm:$0xff]
    %v55 = vld [vmem:[%s1 + $0xf8] sm:$0xff]
    %56 = vmatprep.subr.mxu0 %v25
    %57 = vmatpush1.msra.mxu0 %v24
    %58 = vmatprep.subr.mxu0 %v27
    %59 = vmatpush1.msra.mxu0 %v26
    %60 = vmatprep.subr.mxu0 %v29
    %61 = vmatpush1.msra.mxu0 %v28
    %62 = vmatprep.subr.mxu0 %v31
    %63 = vmatpush1.msra.mxu0 %v30
    %64 = vmatprep.subr.mxu0 %v33
    %65 = vmatpush1.msra.mxu0 %v32
    %66 = vmatprep.subr.mxu0 %v35
    %67 = vmatpush1.msra.mxu0 %v34
    %68 = vmatprep.subr.mxu0 %v37
    %69 = vmatpush1.msra.mxu0 %v36
    %70 = vmatprep.subr.mxu0 %v39
    %71 = vmatpush1.msra.mxu0 %v38
    %72 = vmatprep.subr.mxu0 %v41
    %73 = vmatpush1.msra.mxu0 %v40
    %74 = vmatprep.subr.mxu0 %v43
    %75 = vmatpush1.msra.mxu0 %v42
    %76 = vmatprep.subr.mxu0 %v45
    %77 = vmatpush1.msra.mxu0 %v44
    %78 = vmatprep.subr.mxu0 %v47
    %79 = vmatpush1.msra.mxu0 %v46
    %80 = vmatprep.subr.mxu0 %v49
    %81 = vmatpush1.msra.mxu0 %v48
    %82 = vmatprep.subr.mxu0 %v51
    %83 = vmatpush1.msra.mxu0 %v50
    %84 = vmatprep.subr.mxu0 %v53
    %85 = vmatpush1.msra.mxu0 %v52
    %86 = vmatprep.subr.mxu0 %v55
    %87 = vmatpush1.msra.mxu0 %v54
    %88 = vmatprep.subr.mxu0 0.0
    %89 = vmatpush1.msra.mxu0 0.0
    %90 = vmatprep.subr.mxu0 0.0
    %91 = vmatpush1.msra.mxu0 0.0
    %92 = vmatprep.subr.mxu0 0.0
    %93 = vmatpush1.msra.mxu0 0.0
    %94 = vmatprep.subr.mxu0 0.0
    %95 = vmatpush1.msra.mxu0 0.0
    %96 = vmatprep.subr.mxu0 0.0
    %97 = vmatpush1.msra.mxu0 0.0
    %98 = vmatprep.subr.mxu0 0.0
    %99 = vmatpush1.msra.mxu0 0.0
    %100 = vmatprep.subr.mxu0 0.0
    %101 = vmatpush1.msra.mxu0 0.0
    %102 = vmatprep.subr.mxu0 0.0
    %103 = vmatpush1.msra.mxu0 0.0
    %104 = vmatprep.subr.mxu0 0.0
    %105 = vmatpush1.msra.mxu0 0.0
    %106 = vmatprep.subr.mxu0 0.0
    %107 = vmatpush1.msra.mxu0 0.0
    %108 = vmatprep.subr.mxu0 0.0
    %109 = vmatpush1.msra.mxu0 0.0
    %110 = vmatprep.subr.mxu0 0.0
    %111 = vmatpush1.msra.mxu0 0.0
    %112 = vmatprep.subr.mxu0 0.0
    %113 = vmatpush1.msra.mxu0 0.0
    %114 = vmatprep.subr.mxu0 0.0
    %115 = vmatpush1.msra.mxu0 0.0
    %116 = vmatprep.subr.mxu0 0.0
    %117 = vmatpush1.msra.mxu0 0.0
    %118 = vmatprep.subr.mxu0 0.0
    %119 = vmatpush1.msra.mxu0 0.0
    %120 = vmatprep.mubr.f32.mxu0 0.0
    %121 = vmatmul.mubr.f32.gmra.mrb[0].mxu0 %v23
    %v122 = vpop.f32.mrb[0].mxu0
    %v123 = vadd.f32 0.0, %v122
    %v124 = vpop.f32.mrb[0].mxu0
    %v125 = vadd.f32 0.0, %v124
    %126 = vdwg.mxu0
    %v127 = vld [vmem:[%s2] sm:$0x1]
    %v129 = vlaneseq
    %v130 = vshrl.u32 %v129, 7
    %v131 = vsub.s32 0, %v130
    %v132 = vrot.slane %v127, %v131
    %v134 = vadd.f32 %v123, %v132
    %v135 = vld [vmem:[%s3] sm:$0xff]
    %v136 = vld [vmem:[%s3 + $0x8] sm:$0xff]
    %v137 = vld [vmem:[%s3 + $0x10] sm:$0xff]
    %v138 = vld [vmem:[%s3 + $0x18] sm:$0xff]
    %v139 = vld [vmem:[%s3 + $0x20] sm:$0xff]
    %v140 = vld [vmem:[%s3 + $0x28] sm:$0xff]
    %v141 = vld [vmem:[%s3 + $0x30] sm:$0xff]
    %v142 = vld [vmem:[%s3 + $0x38] sm:$0xff]
    %v143 = vld [vmem:[%s3 + $0x40] sm:$0xff]
    %v144 = vld [vmem:[%s3 + $0x48] sm:$0xff]
    %v145 = vld [vmem:[%s3 + $0x50] sm:$0xff]
    %v146 = vld [vmem:[%s3 + $0x58] sm:$0xff]
    %v147 = vld [vmem:[%s3 + $0x60] sm:$0xff]
    %v148 = vld [vmem:[%s3 + $0x68] sm:$0xff]
    %v149 = vld [vmem:[%s3 + $0x70] sm:$0xff]
    %v150 = vld [vmem:[%s3 + $0x78] sm:$0xff]
    %v151 = vld [vmem:[%s4] sm:$0x1]
    %v153 = vlaneseq
    %v154 = vshrl.u32 %v153, 7
    %v155 = vsub.s32 0, %v154
    %v156 = vrot.slane %v151, %v155
    %158 = vmatprep.subr.mxu0 0.0
    %159 = vmatpush1.msra.mxu0 %v135
    %160 = vmatprep.subr.mxu0 0.0
    %161 = vmatpush1.msra.mxu0 %v136
    %162 = vmatprep.subr.mxu0 0.0
    %163 = vmatpush1.msra.mxu0 %v137
    %164 = vmatprep.subr.mxu0 0.0
    %165 = vmatpush1.msra.mxu0 %v138
    %166 = vmatprep.subr.mxu0 0.0
    %167 = vmatpush1.msra.mxu0 %v139
    %168 = vmatprep.subr.mxu0 0.0
    %169 = vmatpush1.msra.mxu0 %v140
    %170 = vmatprep.subr.mxu0 0.0
    %171 = vmatpush1.msra.mxu0 %v141
    %172 = vmatprep.subr.mxu0 0.0
    %173 = vmatpush1.msra.mxu0 %v142
    %174 = vmatprep.subr.mxu0 0.0
    %175 = vmatpush1.msra.mxu0 %v143
    %176 = vmatprep.subr.mxu0 0.0
    %177 = vmatpush1.msra.mxu0 %v144
    %178 = vmatprep.subr.mxu0 0.0
    %179 = vmatpush1.msra.mxu0 %v145
    %180 = vmatprep.subr.mxu0 0.0
    %181 = vmatpush1.msra.mxu0 %v146
    %182 = vmatprep.subr.mxu0 0.0
    %183 = vmatpush1.msra.mxu0 %v147
    %184 = vmatprep.subr.mxu0 0.0
    %185 = vmatpush1.msra.mxu0 %v148
    %186 = vmatprep.subr.mxu0 0.0
    %187 = vmatpush1.msra.mxu0 %v149
    %188 = vmatprep.subr.mxu0 0.0
    %189 = vmatpush1.msra.mxu0 %v150
    %190 = vmatprep.subr.mxu0 0.0
    %191 = vmatpush1.msra.mxu0 0.0
    %192 = vmatprep.subr.mxu0 0.0
    %193 = vmatpush1.msra.mxu0 0.0
    %194 = vmatprep.subr.mxu0 0.0
    %195 = vmatpush1.msra.mxu0 0.0
    %196 = vmatprep.subr.mxu0 0.0
    %197 = vmatpush1.msra.mxu0 0.0
    %198 = vmatprep.subr.mxu0 0.0
    %199 = vmatpush1.msra.mxu0 0.0
    %200 = vmatprep.subr.mxu0 0.0
    %201 = vmatpush1.msra.mxu0 0.0
    %202 = vmatprep.subr.mxu0 0.0
    %203 = vmatpush1.msra.mxu0 0.0
    %204 = vmatprep.subr.mxu0 0.0
    %205 = vmatpush1.msra.mxu0 0.0
    %206 = vmatprep.subr.mxu0 0.0
    %207 = vmatpush1.msra.mxu0 0.0
    %208 = vmatprep.subr.mxu0 0.0
    %209 = vmatpush1.msra.mxu0 0.0
    %210 = vmatprep.subr.mxu0 0.0
    %211 = vmatpush1.msra.mxu0 0.0
    %212 = vmatprep.subr.mxu0 0.0
    %213 = vmatpush1.msra.mxu0 0.0
    %214 = vmatprep.subr.mxu0 0.0
    %215 = vmatpush1.msra.mxu0 0.0
    %216 = vmatprep.subr.mxu0 0.0
    %217 = vmatpush1.msra.mxu0 0.0
    %218 = vmatprep.subr.mxu0 0.0
    %219 = vmatpush1.msra.mxu0 0.0
    %220 = vmatprep.subr.mxu0 0.0
    %221 = vmatpush1.msra.mxu0 0.0
    %222 = vmatprep.mubr.f32.mxu0 0.0
    %223 = vmatmul.mubr.f32.gmra.mrb[0].mxu0 %v125
    %v224 = vpop.f32.mrb[0].mxu0
    %v225 = vadd.f32 %v156, %v224
    %v226 = vpop.f32.mrb[0].mxu0
    %227 = vdwg.mxu0
    %228 = vst [vmem:[#allocation2] sm:$0xff] %v134
    %v229 = vrot.slane %v134, 4
    %v230 = vadd.f32 %v134, %v229
    %v231 = vrot.slane %v230, 2
    %v232 = vadd.f32 %v230, %v231
    %v233 = vrot.slane %v232, 1
    %v234 = vadd.f32 %v232, %v233
    %v235 = vmul.f32 %v134, %v134
    %v236 = vrot.slane %v235, 4
    %v237 = vadd.f32 %v235, %v236
    %v238 = vrot.slane %v237, 2
    %v239 = vadd.f32 %v237, %v238
    %v240 = vrot.slane %v239, 1
    %v241 = vadd.f32 %v239, %v240
    %v242 = vsub.f32 %v225, %v134
    %v243 = vmul.f32 %v242, %v242
    %v244 = vrot.slane %v243, 4
    %v245 = vadd.f32 %v243, %v244
    %v246 = vrot.slane %v245, 2
    %v247 = vadd.f32 %v245, %v246
    %v248 = vrot.slane %v247, 1
    %v249 = vadd.f32 %v247, %v248
    %vm250 = vcmask 1040384
    %v251 = vsel %vm250, %v234, %v241
    %vm252 = vcmask 1041408
    %v253 = vsel %vm252, %v251, %v249
    %254 = vst [vmem:[%s6] sm:$0x7] %v253
    // Predicated region
    $region22: #{wrapped_lockd_linear_forward.1} parent=1 // pred_check
      _
    $region23: #{wrapped_lockd_linear_forward.1} parent=1 // pred_check_branch
      %256 = sbr.rel (0) target = $region25
    $region24: #{wrapped_lockd_linear_forward.1} parent=1 // pred_region
      %s258 = ssub.s32 128, 128
      %259 = vsyncadd [#allocation3], %s258
      %s261 = sshll.u32 [#allocation2], 4
      %s262 = int_to_ptr.vmem [resolvable:$true] %s261
      %264 = dma.vmem_to_hbm [thread:$0]  %s262, 128, %s5, [#allocation3]
    $region25: #{wrapped_lockd_linear_forward.1} parent=1 // pred_fallthru
      _
    // Predicated region
    $region26: #{wrapped_lockd_linear_forward.1} parent=1 // pred_check
      _
    $region27: #{wrapped_lockd_linear_forward.1} parent=1 // pred_check_branch
      %266 = sbr.rel (0) target = $region29
    $region28: #{wrapped_lockd_linear_forward.1} parent=1 // pred_region
      _
    $region29: #{wrapped_lockd_linear_forward.1} parent=1 // pred_fallthru
      _
    // Predicated region
    $region30: #{wrapped_lockd_linear_forward.1} parent=1 // pred_check
      _
    $region31: #{wrapped_lockd_linear_forward.1} parent=1 // pred_check_branch
      %268 = sbr.rel (0) target = $region33
    $region32: #{wrapped_lockd_linear_forward.1} parent=1 // pred_region
      %269 = dma.done [#allocation3], 128
    $region33: #{wrapped_lockd_linear_forward.1} parent=1 // pred_fallthru
      _
    // Predicated region
    $region34: #{wrapped_lockd_linear_forward.1} parent=1 // pred_check
      _
    $region35: #{wrapped_lockd_linear_forward.1} parent=1 // pred_check_branch
      %271 = sbr.rel (0) target = $region37
    $region36: #{wrapped_lockd_linear_forward.1} parent=1 // pred_region
      _
    $region37: #{wrapped_lockd_linear_forward.1} parent=1 // pred_fallthru
      _
    %272 = vsyncpa [#allocation3], 1

</llo_original>
